<compile_context>
chip_gen: v5e
topology: v5e:2x2
jax: 0.10.0
libtpu: 0.0.40
codegen_flags: <defaults>
</compile_context>

<pallas_src>
import functools

import jax
import jax.numpy as jnp
from jax import lax
from jax.experimental import pallas as pl
from jax.experimental.pallas import tpu as pltpu


ALPHA = 0.2
_TARGET_STEP_BYTES = 4 * 1024 * 1024   # HBM bytes moved per grid step (review item 1)


def _round_down(x, m):
    return max(m, (x // m) * m)


def _vmem_budgets():
    """(tile_budget_bytes, vmem_limit_bytes) derived from the chip's VMEM capacity."""
    cap = 64 * 1024 * 1024          # conservative fallback (v7x per-core size)
    try:
        info = pltpu.get_tpu_info()
        cap = int(getattr(info, "vmem_capacity_bytes", cap) or cap)
    except Exception:
        pass
    # ~half of physical VMEM for the streamed input tiles, capped at 48 MiB
    # (v5e/v6e: 48 MiB tiles / 64 MiB limit; v7x (64 MiB phys): 32 / 48).
    tile_budget = min(cap // 2, 48 * 1024 * 1024)
    vmem_limit = min(cap - 8 * 1024 * 1024, tile_budget + 16 * 1024 * 1024)
    return tile_budget, int(vmem_limit)


def _num_tensorcores():
    """TensorCores available to shard the 'parallel' grid axis (1 on v5e/v6e)."""
    try:
        info = pltpu.get_tpu_info()
        for attr in ("num_cores", "core_count", "num_tensorcores",
                     "tensor_core_count", "cores_per_chip"):
            v = getattr(info, attr, None)
            if v:
                return max(1, int(v))
    except Exception:
        pass
    return 1


def _triplet_loss_kernel(apn_ref, part_ref, acc_ref, *, b, tb, nb, alpha, needs_mask):
    """apn_ref: (3, TB, D) VMEM tile; part_ref: (1, 8, 128) VMEM per-core partials;
    acc_ref: (2,) SMEM running (total, count) — per-core on multi-core chips."""
    c = pl.program_id(0)          # "parallel" axis (per-core chunk of the batch)
    i = pl.program_id(1)          # "arbitrary" reduction axis within the chunk

    @pl.when(i == 0)
    def _init():
        acc_ref[0] = jnp.float32(0.0)   # running sum of basic_loss over kept rows
        acc_ref[1] = jnp.float32(0.0)   # running count of kept rows

    # Upcast (no-op for f32 inputs, cheap VPU filler for bf16) before sub/square.
    a = apn_ref[0].astype(jnp.float32)
    p = apn_ref[1].astype(jnp.float32)
    n = apn_ref[2].astype(jnp.float32)

    dp = a - p
    dn = a - n
    pos_dist = jnp.sqrt(jnp.sum(dp * dp, axis=-1, keepdims=True))   # (TB, 1) f32
    neg_dist = jnp.sqrt(jnp.sum(dn * dn, axis=-1, keepdims=True))   # (TB, 1) f32
    # keep == ((neg_dist - pos_dist) < alpha) == (basic > 0); reuse `basic`.
    basic = pos_dist - neg_dist + alpha

    def _accumulate(keep):
        acc_ref[0] = acc_ref[0] + jnp.sum(jnp.where(keep, basic, jnp.zeros_like(basic)))
        acc_ref[1] = acc_ref[1] + jnp.sum(keep.astype(jnp.float32))

    if needs_mask:
        # Only edge/padding tiles need the row-validity mask.  Rows past the
        # logical batch are read from padded / stale VMEM (garbage, possibly
        # NaN/Inf), so they MUST be masked out here — do not drop the AND with
        # `valid` in a future refactor.
        g = c * nb + i                       # global tile index (unclamped)
        is_edge = (g + 1) * tb > b

        @pl.when(jnp.logical_not(is_edge))
        def _steady():
            _accumulate(basic > 0.0)

        @pl.when(is_edge)
        def _edge():
            row = g * tb + lax.broadcasted_iota(jnp.int32, basic.shape, 0)
            _accumulate(jnp.logical_and(basic > 0.0, row < b))
    else:
        _accumulate(basic > 0.0)

    @pl.when(i == pl.num_programs(1) - 1)
    def _finalize():
        # Lane 0 <- total, lane 1 <- count, rest 0; full lane-dense block store.
        lane = lax.broadcasted_iota(jnp.int32, part_ref.shape, 2)
        part_ref[...] = jnp.where(lane == 0, acc_ref[0],
                                  jnp.where(lane == 1, acc_ref[1], jnp.float32(0.0)))


def triplet_loss(output: jnp.ndarray, alpha: float = ALPHA,
                 tb_cap: int | None = None, num_cores: int | None = None):
    """output: (3*B, D) float (rows = anchor | positive | negative). Scalar f32 loss."""
    assert output.ndim == 2 and output.shape[0] % 3 == 0
    total_rows, d = output.shape
    b = total_rows // 3
    dtype = output.dtype
    itemsize = jnp.dtype(dtype).itemsize
    row_mult = 8 if itemsize >= 4 else 16            # sublane packing for bf16/fp8

    # Free view: (3B, D) -> (3, B, D) is a contiguous reshape (no HBM copy); the
    # (3, TB, D) block delivers matching anchor/positive/negative rows together.
    x = output.reshape(3, b, d)

    tile_budget, vmem_limit = _vmem_budgets()
    d_pad = ((d + 127) // 128) * 128                  # VMEM lane padding of the tile

    if tb_cap is None:
        # (1) rows giving ~_TARGET_STEP_BYTES of actual HBM traffic per step
        tb_target = max(row_mult, _TARGET_STEP_BYTES // (3 * d * itemsize))
        # (2) VMEM ceiling: 2 pipeline buffers of the (3, TB, D) tile plus ~6
        #     f32 (TB, D)-sized compiler temporaries for the distance chain.
        per_row_vmem = 2 * 3 * d_pad * itemsize + 6 * d_pad * 4
        tb_vmem = max(row_mult, tile_budget // per_row_vmem)
        tb_cap = _round_down(min(tb_target, tb_vmem), row_mult)
    tb = b if b <= tb_cap else tb_cap                 # TB == B is always layout-legal

    total_tiles = pl.cdiv(b, tb)
    nc = _num_tensorcores() if num_cores is None else int(num_cores)
    nc = max(1, min(nc, total_tiles))                 # leading "parallel" axis (v7x)
    nb = pl.cdiv(total_tiles, nc)                     # reduction steps per core
    padded_rows = nc * nb * tb
    needs_mask = padded_rows > b                      # static: skip mask if exact cover
    last_block = total_tiles - 1

    kernel = functools.partial(_triplet_loss_kernel, b=b, tb=tb, nb=nb,
                               alpha=float(alpha), needs_mask=needs_mask)

    def in_map(c, i, _nb=nb, _last=last_block):
        # Clamp so padding tiles past the batch re-read the last block (their
        # rows are masked out in the kernel); avoids fully-OOB DMAs.
        return (0, jnp.minimum(c * _nb + i, _last), 0)

    partials = pl.pallas_call(
        kernel,
        out_shape=jax.ShapeDtypeStruct((nc, 8, 128), jnp.float32),
        grid=(nc, nb),
        in_specs=[pl.BlockSpec((3, tb, d), in_map)],
        out_specs=pl.BlockSpec((1, 8, 128), lambda c, i: (c, 0, 0)),
        scratch_shapes=[pltpu.SMEM((2,), jnp.float32)],
        compiler_params=pltpu.CompilerParams(
            dimension_semantics=("parallel", "arbitrary"),
            vmem_limit_bytes=vmem_limit,
        ),
    )(x)

    total = jnp.sum(partials[:, 0, 0])
    count = jnp.sum(partials[:, 0, 1])
    return total / jnp.maximum(jnp.float32(1.0), count)


def _reference(output, alpha=ALPHA):
    x = output.astype(jnp.float32)
    b = x.shape[0] // 3
    a, p, n = x[:b], x[b:2 * b], x[2 * b:]
    pos_dist = jnp.sqrt(jnp.sum((a - p) ** 2, axis=-1))
    neg_dist = jnp.sqrt(jnp.sum((a - n) ** 2, axis=-1))
    keep = (neg_dist - pos_dist) < alpha
    basic = pos_dist - neg_dist + alpha
    total = jnp.sum(jnp.where(keep, basic, 0.0))
    count = jnp.sum(keep.astype(jnp.float32))
    return total / jnp.maximum(1.0, count)


if __name__ == "__main__":
    # Case 1: small shapes consistent with the module (8 triplets, 32-dim embeddings).
    B, D = 8, 32
    output = jax.random.normal(jax.random.PRNGKey(0), (3 * B, D), dtype=jnp.float32)
    loss = jax.block_until_ready(triplet_loss(output))
    ref = _reference(output)
    assert jnp.allclose(loss, ref, atol=1e-5, rtol=1e-5), (loss, ref)

    # Case 2: tiled + partial-last-tile masking + per-core partials path
    # (B=20, TB=8, nc=2 -> grid (2, 2), one padding tile fully masked out).
    B2, D2 = 20, 32
    output2 = jax.random.normal(jax.random.PRNGKey(1), (3 * B2, D2), dtype=jnp.float32)
    loss2 = jax.block_until_ready(triplet_loss(output2, tb_cap=8, num_cores=2))
    ref2 = _reference(output2)
    assert jnp.allclose(loss2, ref2, atol=1e-5, rtol=1e-5), (loss2, ref2)

    # Case 3: bf16 embeddings (upcast to f32 inside the kernel; f32 accumulation).
    B3, D3 = 16, 64
    output3 = jax.random.normal(jax.random.PRNGKey(2), (3 * B3, D3),
                                dtype=jnp.float32).astype(jnp.bfloat16)
    loss3 = jax.block_until_ready(triplet_loss(output3))
    ref3 = _reference(output3)
    assert jnp.allclose(loss3, ref3, atol=1e-5, rtol=1e-5), (loss3, ref3)

    print("KERNEL_OK")
</pallas_src>

<mosaic_0001>
module attributes {stable_mosaic.version = 11 : i64} {
  func.func @_triplet_loss_kernel(%arg0: i32, %arg1: i32, %arg2: memref<3x8x32xf32, #tpu.memory_space<vmem>>, %arg3: memref<1x8x128xf32, #tpu.memory_space<vmem>>, %arg4: memref<2xf32, #tpu.memory_space<smem>>) attributes {dimension_semantics = [#tpu.dimension_semantics<parallel>, #tpu.dimension_semantics<arbitrary>], iteration_bounds = array<i64: 1, 1>, scalar_prefetch = 0 : i64, scratch_operands = 1 : i64, tpu.core_type = #tpu.core_type<tc>, window_params = [{transform_indices = @transform_0, window_bounds = array<i64: 3, 8, 32>}, {transform_indices = @transform_1, window_bounds = array<i64: 1, 8, 128>}]} {
    %c0_i32 = arith.constant 0 : i32
    %0 = arith.cmpi eq, %arg1, %c0_i32 : i32
    %1 = arith.extui %0 : i1 to i32
    %c0_i32_0 = arith.constant 0 : i32
    %2 = arith.cmpi ne, %1, %c0_i32_0 : i32
    scf.if %2 {
      %cst_19 = arith.constant 0.000000e+00 : f32
      %c0_20 = arith.constant 0 : index
      %45 = memref.load %arg4[%c0_20] : memref<2xf32, #tpu.memory_space<smem>>
      memref.store %cst_19, %arg4[%c0_20] : memref<2xf32, #tpu.memory_space<smem>>
      %cst_21 = arith.constant 0.000000e+00 : f32
      %c1_22 = arith.constant 1 : index
      %46 = memref.load %arg4[%c1_22] : memref<2xf32, #tpu.memory_space<smem>>
      memref.store %cst_21, %arg4[%c1_22] : memref<2xf32, #tpu.memory_space<smem>>
    } else {
    }
    %c0 = arith.constant 0 : index
    %c0_1 = arith.constant 0 : index
    %c0_2 = arith.constant 0 : index
    %3 = vector.load %arg2[%c0, %c0_1, %c0_2] : memref<3x8x32xf32, #tpu.memory_space<vmem>>, vector<1x8x32xf32>
    %4 = vector.shape_cast %3 : vector<1x8x32xf32> to vector<8x32xf32>
    %c1 = arith.constant 1 : index
    %c0_3 = arith.constant 0 : index
    %c0_4 = arith.constant 0 : index
    %5 = vector.load %arg2[%c1, %c0_3, %c0_4] : memref<3x8x32xf32, #tpu.memory_space<vmem>>, vector<1x8x32xf32>
    %6 = vector.shape_cast %5 : vector<1x8x32xf32> to vector<8x32xf32>
    %c2 = arith.constant 2 : index
    %c0_5 = arith.constant 0 : index
    %c0_6 = arith.constant 0 : index
    %7 = vector.load %arg2[%c2, %c0_5, %c0_6] : memref<3x8x32xf32, #tpu.memory_space<vmem>>, vector<1x8x32xf32>
    %8 = vector.shape_cast %7 : vector<1x8x32xf32> to vector<8x32xf32>
    %9 = arith.subf %4, %6 : vector<8x32xf32>
    %10 = arith.subf %4, %8 : vector<8x32xf32>
    %11 = arith.mulf %9, %9 : vector<8x32xf32>
    %cst = arith.constant dense<0.000000e+00> : vector<8xf32>
    %12 = vector.multi_reduction <add>, %11, %cst [1] : vector<8x32xf32> to vector<8xf32>
    %13 = vector.shape_cast %12 : vector<8xf32> to vector<8x1xf32>
    %14 = math.sqrt %13 : vector<8x1xf32>
    %15 = arith.mulf %10, %10 : vector<8x32xf32>
    %cst_7 = arith.constant dense<0.000000e+00> : vector<8xf32>
    %16 = vector.multi_reduction <add>, %15, %cst_7 [1] : vector<8x32xf32> to vector<8xf32>
    %17 = vector.shape_cast %16 : vector<8xf32> to vector<8x1xf32>
    %18 = math.sqrt %17 : vector<8x1xf32>
    %19 = arith.subf %14, %18 : vector<8x1xf32>
    %cst_8 = arith.constant 2.000000e-01 : f32
    %20 = vector.broadcast %cst_8 : f32 to vector<8x1xf32>
    %21 = arith.addf %19, %20 : vector<8x1xf32>
    %cst_9 = arith.constant 0.000000e+00 : f32
    %22 = vector.broadcast %cst_9 : f32 to vector<8x1xf32>
    %23 = arith.cmpf ogt, %21, %22 : vector<8x1xf32>
    %c0_10 = arith.constant 0 : index
    %24 = memref.load %arg4[%c0_10] : memref<2xf32, #tpu.memory_space<smem>>
    %cst_11 = arith.constant 0.000000e+00 : f32
    %25 = vector.broadcast %cst_11 : f32 to vector<8x1xf32>
    %26 = arith.select %23, %21, %25 : vector<8x1xi1>, vector<8x1xf32>
    %27 = vector.shape_cast %26 : vector<8x1xf32> to vector<1x8x1xf32>
    %cst_12 = arith.constant dense<0.000000e+00> : vector<1xf32>
    %28 = vector.multi_reduction <add>, %27, %cst_12 [1, 2] : vector<1x8x1xf32> to vector<1xf32>
    %29 = vector.shape_cast %28 : vector<1xf32> to vector<1x1x1xf32>
    %30 = vector.extract %29[0, 0, 0] : f32 from vector<1x1x1xf32>
    %31 = arith.addf %24, %30 : f32
    %c0_13 = arith.constant 0 : index
    %32 = memref.load %arg4[%c0_13] : memref<2xf32, #tpu.memory_space<smem>>
    memref.store %31, %arg4[%c0_13] : memref<2xf32, #tpu.memory_space<smem>>
    %c1_14 = arith.constant 1 : index
    %33 = memref.load %arg4[%c1_14] : memref<2xf32, #tpu.memory_space<smem>>
    %34 = arith.extui %23 : vector<8x1xi1> to vector<8x1xi32>
    %35 = arith.sitofp %34 : vector<8x1xi32> to vector<8x1xf32>
    %36 = vector.shape_cast %35 : vector<8x1xf32> to vector<1x8x1xf32>
    %cst_15 = arith.constant dense<0.000000e+00> : vector<1xf32>
    %37 = vector.multi_reduction <add>, %36, %cst_15 [1, 2] : vector<1x8x1xf32> to vector<1xf32>
    %38 = vector.shape_cast %37 : vector<1xf32> to vector<1x1x1xf32>
    %39 = vector.extract %38[0, 0, 0] : f32 from vector<1x1x1xf32>
    %40 = arith.addf %33, %39 : f32
    %c1_16 = arith.constant 1 : index
    %41 = memref.load %arg4[%c1_16] : memref<2xf32, #tpu.memory_space<smem>>
    memref.store %40, %arg4[%c1_16] : memref<2xf32, #tpu.memory_space<smem>>
    %c0_i32_17 = arith.constant 0 : i32
    %42 = arith.cmpi eq, %arg1, %c0_i32_17 : i32
    %43 = arith.extui %42 : i1 to i32
    %c0_i32_18 = arith.constant 0 : i32
    %44 = arith.cmpi ne, %43, %c0_i32_18 : i32
    scf.if %44 {
      %45 = tpu.iota {dimensions = array<i32: 2>} : vector<1x8x128xi32>
      %c0_i32_19 = arith.constant 0 : i32
      %46 = vector.broadcast %c0_i32_19 : i32 to vector<1x8x128xi32>
      %47 = arith.cmpi eq, %45, %46 : vector<1x8x128xi32>
      %c0_20 = arith.constant 0 : index
      %48 = memref.load %arg4[%c0_20] : memref<2xf32, #tpu.memory_space<smem>>
      %c1_i32 = arith.constant 1 : i32
      %49 = vector.broadcast %c1_i32 : i32 to vector<1x8x128xi32>
      %50 = arith.cmpi eq, %45, %49 : vector<1x8x128xi32>
      %c1_21 = arith.constant 1 : index
      %51 = memref.load %arg4[%c1_21] : memref<2xf32, #tpu.memory_space<smem>>
      %cst_22 = arith.constant 0.000000e+00 : f32
      %52 = vector.broadcast %51 : f32 to vector<1x8x128xf32>
      %53 = vector.broadcast %cst_22 : f32 to vector<1x8x128xf32>
      %54 = arith.select %50, %52, %53 : vector<1x8x128xi1>, vector<1x8x128xf32>
      %55 = vector.broadcast %48 : f32 to vector<1x8x128xf32>
      %56 = arith.select %47, %55, %54 : vector<1x8x128xi1>, vector<1x8x128xf32>
      %c0_23 = arith.constant 0 : index
      %c0_24 = arith.constant 0 : index
      %c0_25 = arith.constant 0 : index
      %57 = vector.load %arg3[%c0_23, %c0_24, %c0_25] : memref<1x8x128xf32, #tpu.memory_space<vmem>>, vector<1x8x128xf32>
      tpu.vector_store %arg3[%c0_23, %c0_24, %c0_25], %56 {strides = array<i32>} : memref<1x8x128xf32, #tpu.memory_space<vmem>>, vector<1x8x128xf32>,
    } else {
    }
    return
  }
  func.func @transform_0(%arg0: i32, %arg1: i32) -> (i32, i32, i32) {
    %c1_i32 = arith.constant 1 : i32
    %0 = arith.muli %arg0, %c1_i32 : i32
    %1 = arith.addi %0, %arg1 : i32
    %c0_i32 = arith.constant 0 : i32
    %2 = arith.minsi %1, %c0_i32 : i32
    %c0_i32_0 = arith.constant 0 : i32
    %c0_i32_1 = arith.constant 0 : i32
    %c0_i32_2 = arith.constant 0 : i32
    return %c0_i32_0, %2, %c0_i32_1 : i32, i32, i32
  }
  func.func @transform_1(%arg0: i32, %arg1: i32) -> (i32, i32, i32) {
    %c0_i32 = arith.constant 0 : i32
    %c0_i32_0 = arith.constant 0 : i32
    %c0_i32_1 = arith.constant 0 : i32
    return %arg0, %c0_i32, %c0_i32_0 : i32, i32, i32
  }
}

</mosaic_0001>

<llo_original>
// kernel: tpu_custom_call.1
$region0: #{tpu_custom_call.1}
  #allocation0 [shape = 'u32[]', space=smem, size = 0x4, offset = 0x4, fixed_abs, tag = 'smem constant byte address 0x4 - core index']
  #allocation1 [shape = 'u32[72,128]{1,0:T(1,128)}', space=vmem, size = 0x9000, scoped, tag = 'internal scratch']
  #allocation2 [shape = 'f32[2]{0:T(128)}', space=smem, size = 0x200, scoped, tag = 'scratch operand']
  %s0 = inlined_call_operand.hbm [shape: f32[3,8,32], index: 0, kind: input, shape index: {}]
  %s1 = inlined_call_operand.hbm [shape: f32[1,8,128], index: 1, kind: output, shape index: {}]
  %s2 = sld [smem:[#allocation0]]
  $region26: #{tpu_custom_call.1} parent=0
    _
  %s4 = ssub.s32 1, %s2
  %s5 = scalar_select 0, %s4, %s2
  $region1: #{tpu_custom_call.1} parent=0
    #allocation3 [shape = 'u8[12288]{0}', space=vmem, size = 0x3000, scoped, tag = 'input window, operand 0, single buffered']
    #allocation4 [shape = 's32[1]{0}', space=sflag, size = 0x4, scoped, tag = 'scoped memory for tpu_custom_call.1']
    #allocation5 [shape = 's32[1]{0}', space=sflag, size = 0x4, scoped, tag = 'scoped memory for tpu_custom_call.1']
    #allocation6 [shape = 'u8[4096]{0}', space=vmem, size = 0x1000, scoped, tag = 'output window, operand 0, single buffered']
    %6 = vsyncpa [#allocation4], 0
    %7 = vsyncpa [#allocation5], 0
    // Predicated region
    $region2: #{tpu_custom_call.1} parent=1 // pred_check
      _
    $region3: #{tpu_custom_call.1} parent=1 // pred_check_branch
      %9 = sbr.rel (0) target = $region5
    $region4: #{tpu_custom_call.1} parent=1 // pred_region
      %s10 = sadd.s32 0, 0
      %p11 = scmp.lt.s32.totalorder %s10, 0
      %s12 = scalar_select %p11, %s10, 0
      %14 = vsyncadd [#allocation4], 0
      %s15 = smul.addr %s12, 8
      %s16 = scalar_lea.hbm %s0, %s15
      %s17 = sshll.u32 %s16, 4
      %s18 = int_to_ptr.hbm [resolvable:$true] %s17
      %s19 = sshll.u32 [#allocation3], 4
      %s20 = int_to_ptr.vmem [resolvable:$true] %s19
      %25 = dma.hbm_to_vmem [thread:$0]  %s18, 384, %s20, [#allocation4], 128, 128, 8
    $region5: #{tpu_custom_call.1} parent=1 // pred_fallthru
      _
    // Predicated region
    $region6: #{tpu_custom_call.1} parent=1 // pred_check
      _
    $region7: #{tpu_custom_call.1} parent=1 // pred_check_branch
      %27 = sbr.rel (0) target = $region9
    $region8: #{tpu_custom_call.1} parent=1 // pred_region
      %29 = dma.done [#allocation4], 384
    $region9: #{tpu_custom_call.1} parent=1 // pred_fallthru
      _
    %s30 = sadd.s32 0, 0
    %p31 = scmp.lt.s32.totalorder %s30, 0
    %s32 = scalar_select %p31, %s30, 0
    %p33 = scmp.eq.s32.totalorder 0, 0
    // Predicated region
    $region10: #{tpu_custom_call.1} parent=1 // pred_check
      %p34 = pneg %p33
    $region11: #{tpu_custom_call.1} parent=1 // pred_check_branch
      %36 = sbr.rel (%p34) target = $region13
    $region12: #{tpu_custom_call.1} parent=1 // pred_region
      %s37 = scalar_lea.smem [#allocation2], 0
      %38 = sst [smem:[%s37]] 0.0
      %s39 = scalar_lea.smem [#allocation2], 1
      %40 = sst [smem:[%s39]] 0.0
    $region13: #{tpu_custom_call.1} parent=1 // pred_fallthru
      _
    %v41 = vld [vmem:[#allocation3] sm:$0xff]
    %s42 = scalar_lea.vmem [#allocation3], 8
    %v43 = vld [vmem:[%s42] sm:$0xff]
    %s44 = scalar_lea.vmem [#allocation3], 16
    %v45 = vld [vmem:[%s44] sm:$0xff]
    %v46 = vsub.f32 %v41, %v43
    %v47 = vsub.f32 %v41, %v45
    %v48 = vmul.f32 %v46, %v46
    %vm49 = vcmask 261120
    %v50 = vsel %vm49, %v48, 0.0
    %51 = vadd.xlane.f32.xlu0 %v50
    %v52 = vpop.xlane.xlu0 %51
    %v53 = vrsqrt.pop %v52
    %v54 = vmul.f32 %v53, %v52
    %v55 = vmul.f32 %v54, %v53
    %v56 = vmul.f32 0.5, %v55
    %v57 = vsub.f32 1.5, %v56
    %v58 = vmul.f32 %v53, %v57
    %v59 = vmul.f32 %v52, %v58
    %vm60 = vcmp.eq.f32.partialorder %v52, inf
    %v61 = vsel %vm60, %v52, %v59
    %vm62 = vcmp.eq.f32.partialorder %v52, 0.0
    %v63 = vand.u32 %v52, 2147483648
    %v64 = vsel %vm62, %v63, %v61
    %v65 = vmul.f32 %v47, %v47
    %v66 = vsel %vm49, %v65, 0.0
    %67 = vadd.xlane.f32.xlu0 %v66
    %v68 = vpop.xlane.xlu0 %67
    %v69 = vrsqrt.pop %v68
    %v70 = vmul.f32 %v69, %v68
    %v71 = vmul.f32 %v70, %v69
    %v72 = vmul.f32 0.5, %v71
    %v73 = vsub.f32 1.5, %v72
    %v74 = vmul.f32 %v69, %v73
    %v75 = vmul.f32 %v68, %v74
    %vm76 = vcmp.eq.f32.partialorder %v68, inf
    %v77 = vsel %vm76, %v68, %v75
    %vm78 = vcmp.eq.f32.partialorder %v68, 0.0
    %v79 = vand.u32 %v68, 2147483648
    %v80 = vsel %vm78, %v79, %v77
    %v81 = vsub.f32 %v64, %v80
    %v82 = vadd.f32 %v81, 0.2
    %vm83 = vcmp.gt.f32.partialorder %v82, 0.0
    %s84 = sld [smem:[#allocation2]]
    %v85 = vsel %vm83, %v82, 0.0
    %vm86 = vcmask 7168
    %v87 = vsel %vm86, %v85, 0.0
    %88 = vadd.xlane.f32.xlu0 %v87
    %v89 = vpop.xlane.xlu0 %88
    %v90 = vrot.slane %v89, 4
    %v91 = vadd.f32 %v89, %v90
    %v92 = vrot.slane %v91, 2
    %v93 = vadd.f32 %v91, %v92
    %v94 = vrot.slane %v93, 1
    %v95 = vadd.f32 %v93, %v94
    %s96 = vtos %v95
    %s97 = sadd.f32 %s84, %s96
    %s98 = scalar_lea.smem [#allocation2], 0
    %99 = sst [smem:[%s98]] %s97
    %s100 = sld [smem:[#allocation2 + $0x1]]
    %v101 = vsel %vm83, 1, 0
    %v102 = vcvt.s32.f32 %v101
    %v103 = vsel %vm86, %v102, 0.0
    %104 = vadd.xlane.f32.xlu0 %v103
    %v105 = vpop.xlane.xlu0 %104
    %v106 = vrot.slane %v105, 4
    %v107 = vadd.f32 %v105, %v106
    %v108 = vrot.slane %v107, 2
    %v109 = vadd.f32 %v107, %v108
    %v110 = vrot.slane %v109, 1
    %v111 = vadd.f32 %v109, %v110
    %s112 = vtos %v111
    %s113 = sadd.f32 %s100, %s112
    %s114 = scalar_lea.smem [#allocation2], 1
    %115 = sst [smem:[%s114]] %s113
    // Predicated region
    $region14: #{tpu_custom_call.1} parent=1 // pred_check
      %p116 = pneg %p33
    $region15: #{tpu_custom_call.1} parent=1 // pred_check_branch
      %118 = sbr.rel (%p116) target = $region17
    $region16: #{tpu_custom_call.1} parent=1 // pred_region
      %v119 = vlaneseq
      %v120 = vand.u32 %v119, 127
      %vm121 = vcmp.eq.s32.totalorder %v120, 0
      %s122 = sld [smem:[#allocation2]]
      %vm123 = vcmp.eq.s32.totalorder %v120, 1
      %s124 = sld [smem:[#allocation2 + $0x1]]
      %v125 = vstv %s124
      %v126 = vsel %vm123, %v125, 0.0
      %v127 = vstv %s122
      %v128 = vsel %vm121, %v127, %v126
      %129 = vst [vmem:[#allocation6] sm:$0xff] %v128
    $region17: #{tpu_custom_call.1} parent=1 // pred_fallthru
      _
    // Predicated region
    $region18: #{tpu_custom_call.1} parent=1 // pred_check
      _
    $region19: #{tpu_custom_call.1} parent=1 // pred_check_branch
      %131 = sbr.rel (0) target = $region21
    $region20: #{tpu_custom_call.1} parent=1 // pred_region
      %133 = vsyncadd [#allocation5], 0
      %s135 = sshll.u32 [#allocation6], 4
      %s136 = int_to_ptr.vmem [resolvable:$true] %s135
      %s137 = sshll.u32 %s1, 4
      %s138 = int_to_ptr.hbm [resolvable:$true] %s137
      %140 = dma.vmem_to_hbm [thread:$0]  %s136, 128, %s138, [#allocation5]
    $region21: #{tpu_custom_call.1} parent=1 // pred_fallthru
      _
    // Predicated region
    $region22: #{tpu_custom_call.1} parent=1 // pred_check
      _
    $region23: #{tpu_custom_call.1} parent=1 // pred_check_branch
      %142 = sbr.rel (0) target = $region25
    $region24: #{tpu_custom_call.1} parent=1 // pred_region
      %144 = dma.done [#allocation5], 128
    $region25: #{tpu_custom_call.1} parent=1 // pred_fallthru
      _
    %145 = vsyncpa [#allocation4], 1
    %146 = vsyncpa [#allocation5], 1

</llo_original>
